<compile_context>
chip_gen: v7x
topology: tpu7x:2x2x1
jax: 0.10.0
libtpu: 0.0.40
codegen_flags: <defaults>
</compile_context>

<pallas_src>
import jax
import jax.numpy as jnp
from jax.experimental import pallas as pl
from jax.experimental.pallas import tpu as pltpu

LANES = 128
HIDDEN = 16


def mlp_kernel(w1_ref, b1_ref, w2_ref, b2_ref, x_ref, o_ref):
    # x tile is lane-dense: (tile_rows, 128) f32.
    x = x_ref[...]
    acc = jnp.zeros_like(x)
    # Statically unrolled over the 16 hidden units; scalars come from SMEM and
    # broadcast into vregs (VPU mul/add co-issues with EUP tanh).
    for j in range(HIDDEN):
        acc = acc + w2_ref[j] * jnp.tanh(w1_ref[j] * x + b1_ref[j])
    o_ref[...] = acc + b2_ref[0]


def todays_model_forward(x, w1, b1, w2, b2, *, tile_rows=512):
    """x: (N, 1) f32 -> (N, 1) f32 matching nn.Linear(1,16)+Tanh+nn.Linear(16,1)."""
    n = x.shape[0]
    # Weights stored transposed vs PyTorch (in, out); flatten to scalar vectors.
    w1f = w1.reshape(-1).astype(jnp.float32)   # (16,)  = Linear(1,16).weight[:, 0]
    b1f = b1.reshape(-1).astype(jnp.float32)   # (16,)
    w2f = w2.reshape(-1).astype(jnp.float32)   # (16,)  = Linear(16,1).weight[0, :]
    b2f = b2.reshape(-1).astype(jnp.float32)   # (1,)

    # Lane-dense repack: (N, 1) -> (total_rows, 128), rows a multiple of the tile.
    rows_needed = -(-n // LANES)                       # ceil(N / 128)
    rows_needed = max(8, -(-rows_needed // 8) * 8)     # sublane-aligned
    tr = max(8, (min(tile_rows, rows_needed) // 8) * 8)
    total_rows = -(-rows_needed // tr) * tr
    padded_n = total_rows * LANES

    flat = jnp.pad(x.reshape(-1).astype(jnp.float32), (0, padded_n - n))
    x2d = flat.reshape(total_rows, LANES)

    smem = pl.BlockSpec(memory_space=pltpu.MemorySpace.SMEM)
    out2d = pl.pallas_call(
        mlp_kernel,
        out_shape=jax.ShapeDtypeStruct((total_rows, LANES), jnp.float32),
        grid=(total_rows // tr,),
        in_specs=[smem, smem, smem, smem,
                  pl.BlockSpec((tr, LANES), lambda i: (i, 0))],
        out_specs=pl.BlockSpec((tr, LANES), lambda i: (i, 0)),
        compiler_params=pltpu.CompilerParams(
            dimension_semantics=("parallel",)),
    )(w1f, b1f, w2f, b2f, x2d)

    # Drop padded rows/lanes and restore the (N, 1) column layout.
    return out2d.reshape(-1)[:n].reshape(n, 1)


def init_params():
    # Deterministic synthetic init matching nn.Linear(1,16) / nn.Linear(16,1) shapes.
    k = jax.random.PRNGKey(42)
    k1, k2, k3, k4 = jax.random.split(k, 4)
    # PyTorch stores W as (out, in); we store transposed (in, out) for x @ W.
    w1 = jax.random.uniform(k1, (1, 16), jnp.float32, -1.0, 1.0)    # Linear(1,16).weight.T
    b1 = jax.random.uniform(k2, (16,), jnp.float32, -1.0, 1.0)      # Linear(1,16).bias
    w2 = jax.random.uniform(k3, (16, 1), jnp.float32, -0.25, 0.25)  # Linear(16,1).weight.T
    b2 = jax.random.uniform(k4, (1,), jnp.float32, -0.25, 0.25)     # Linear(16,1).bias
    return w1, b1, w2, b2


def reference_forward(x, w1, b1, w2, b2):
    h = jnp.tanh(x @ w1 + b1)
    return h @ w2 + b2


if __name__ == "__main__":
    w1, b1, w2, b2 = init_params()

    # Small case (matches the toy PyTorch usage): N = 8, single tile.
    x_small = jax.random.normal(jax.random.PRNGKey(0), (8, 1), jnp.float32)
    out_small = jax.block_until_ready(todays_model_forward(x_small, w1, b1, w2, b2))
    ref_small = reference_forward(x_small, w1, b1, w2, b2)
    assert out_small.shape == (8, 1)
    assert jnp.allclose(out_small, ref_small, atol=1e-5, rtol=1e-5)

    # Multi-tile case: exercises the pipelined 1-D grid and row padding.
    x_big = jax.random.normal(jax.random.PRNGKey(1), (2048, 1), jnp.float32)
    out_big = jax.block_until_ready(
        todays_model_forward(x_big, w1, b1, w2, b2, tile_rows=8))
    ref_big = reference_forward(x_big, w1, b1, w2, b2)
    assert out_big.shape == (2048, 1)
    assert jnp.allclose(out_big, ref_big, atol=1e-5, rtol=1e-5)

    print("KERNEL_OK")
</pallas_src>

<mosaic_0001>
module attributes {stable_mosaic.version = 11 : i64} {
  func.func @mlp_kernel(%arg0: i32, %arg1: memref<16xf32, #tpu.memory_space<smem>>, %arg2: memref<16xf32, #tpu.memory_space<smem>>, %arg3: memref<16xf32, #tpu.memory_space<smem>>, %arg4: memref<1xf32, #tpu.memory_space<smem>>, %arg5: memref<8x128xf32, #tpu.memory_space<vmem>>, %arg6: memref<8x128xf32, #tpu.memory_space<vmem>>) attributes {dimension_semantics = [#tpu.dimension_semantics<parallel>], iteration_bounds = array<i64: 1>, scalar_prefetch = 0 : i64, scratch_operands = 0 : i64, tpu.core_type = #tpu.core_type<tc>, window_params = [{transform_indices = @transform_0, window_bounds = array<i64: 16>}, {transform_indices = @transform_1, window_bounds = array<i64: 16>}, {transform_indices = @transform_2, window_bounds = array<i64: 16>}, {transform_indices = @transform_3, window_bounds = array<i64: 1>}, {transform_indices = @transform_4, window_bounds = array<i64: 8, 128>}, {transform_indices = @transform_5, window_bounds = array<i64: 8, 128>}]} {
    %c0 = arith.constant 0 : index
    %c0_0 = arith.constant 0 : index
    %0 = vector.load %arg5[%c0, %c0_0] : memref<8x128xf32, #tpu.memory_space<vmem>>, vector<8x128xf32>
    %cst = arith.constant 0.000000e+00 : f32
    %1 = vector.broadcast %cst : f32 to vector<8x128xf32>
    %c0_1 = arith.constant 0 : index
    %2 = memref.load %arg3[%c0_1] : memref<16xf32, #tpu.memory_space<smem>>
    %c0_2 = arith.constant 0 : index
    %3 = memref.load %arg1[%c0_2] : memref<16xf32, #tpu.memory_space<smem>>
    %4 = vector.broadcast %3 : f32 to vector<8x128xf32>
    %5 = arith.mulf %4, %0 : vector<8x128xf32>
    %c0_3 = arith.constant 0 : index
    %6 = memref.load %arg2[%c0_3] : memref<16xf32, #tpu.memory_space<smem>>
    %7 = vector.broadcast %6 : f32 to vector<8x128xf32>
    %8 = arith.addf %5, %7 : vector<8x128xf32>
    %9 = math.tanh %8 : vector<8x128xf32>
    %10 = vector.broadcast %2 : f32 to vector<8x128xf32>
    %11 = arith.mulf %10, %9 : vector<8x128xf32>
    %12 = arith.addf %1, %11 : vector<8x128xf32>
    %c1 = arith.constant 1 : index
    %13 = memref.load %arg3[%c1] : memref<16xf32, #tpu.memory_space<smem>>
    %c1_4 = arith.constant 1 : index
    %14 = memref.load %arg1[%c1_4] : memref<16xf32, #tpu.memory_space<smem>>
    %15 = vector.broadcast %14 : f32 to vector<8x128xf32>
    %16 = arith.mulf %15, %0 : vector<8x128xf32>
    %c1_5 = arith.constant 1 : index
    %17 = memref.load %arg2[%c1_5] : memref<16xf32, #tpu.memory_space<smem>>
    %18 = vector.broadcast %17 : f32 to vector<8x128xf32>
    %19 = arith.addf %16, %18 : vector<8x128xf32>
    %20 = math.tanh %19 : vector<8x128xf32>
    %21 = vector.broadcast %13 : f32 to vector<8x128xf32>
    %22 = arith.mulf %21, %20 : vector<8x128xf32>
    %23 = arith.addf %12, %22 : vector<8x128xf32>
    %c2 = arith.constant 2 : index
    %24 = memref.load %arg3[%c2] : memref<16xf32, #tpu.memory_space<smem>>
    %c2_6 = arith.constant 2 : index
    %25 = memref.load %arg1[%c2_6] : memref<16xf32, #tpu.memory_space<smem>>
    %26 = vector.broadcast %25 : f32 to vector<8x128xf32>
    %27 = arith.mulf %26, %0 : vector<8x128xf32>
    %c2_7 = arith.constant 2 : index
    %28 = memref.load %arg2[%c2_7] : memref<16xf32, #tpu.memory_space<smem>>
    %29 = vector.broadcast %28 : f32 to vector<8x128xf32>
    %30 = arith.addf %27, %29 : vector<8x128xf32>
    %31 = math.tanh %30 : vector<8x128xf32>
    %32 = vector.broadcast %24 : f32 to vector<8x128xf32>
    %33 = arith.mulf %32, %31 : vector<8x128xf32>
    %34 = arith.addf %23, %33 : vector<8x128xf32>
    %c3 = arith.constant 3 : index
    %35 = memref.load %arg3[%c3] : memref<16xf32, #tpu.memory_space<smem>>
    %c3_8 = arith.constant 3 : index
    %36 = memref.load %arg1[%c3_8] : memref<16xf32, #tpu.memory_space<smem>>
    %37 = vector.broadcast %36 : f32 to vector<8x128xf32>
    %38 = arith.mulf %37, %0 : vector<8x128xf32>
    %c3_9 = arith.constant 3 : index
    %39 = memref.load %arg2[%c3_9] : memref<16xf32, #tpu.memory_space<smem>>
    %40 = vector.broadcast %39 : f32 to vector<8x128xf32>
    %41 = arith.addf %38, %40 : vector<8x128xf32>
    %42 = math.tanh %41 : vector<8x128xf32>
    %43 = vector.broadcast %35 : f32 to vector<8x128xf32>
    %44 = arith.mulf %43, %42 : vector<8x128xf32>
    %45 = arith.addf %34, %44 : vector<8x128xf32>
    %c4 = arith.constant 4 : index
    %46 = memref.load %arg3[%c4] : memref<16xf32, #tpu.memory_space<smem>>
    %c4_10 = arith.constant 4 : index
    %47 = memref.load %arg1[%c4_10] : memref<16xf32, #tpu.memory_space<smem>>
    %48 = vector.broadcast %47 : f32 to vector<8x128xf32>
    %49 = arith.mulf %48, %0 : vector<8x128xf32>
    %c4_11 = arith.constant 4 : index
    %50 = memref.load %arg2[%c4_11] : memref<16xf32, #tpu.memory_space<smem>>
    %51 = vector.broadcast %50 : f32 to vector<8x128xf32>
    %52 = arith.addf %49, %51 : vector<8x128xf32>
    %53 = math.tanh %52 : vector<8x128xf32>
    %54 = vector.broadcast %46 : f32 to vector<8x128xf32>
    %55 = arith.mulf %54, %53 : vector<8x128xf32>
    %56 = arith.addf %45, %55 : vector<8x128xf32>
    %c5 = arith.constant 5 : index
    %57 = memref.load %arg3[%c5] : memref<16xf32, #tpu.memory_space<smem>>
    %c5_12 = arith.constant 5 : index
    %58 = memref.load %arg1[%c5_12] : memref<16xf32, #tpu.memory_space<smem>>
    %59 = vector.broadcast %58 : f32 to vector<8x128xf32>
    %60 = arith.mulf %59, %0 : vector<8x128xf32>
    %c5_13 = arith.constant 5 : index
    %61 = memref.load %arg2[%c5_13] : memref<16xf32, #tpu.memory_space<smem>>
    %62 = vector.broadcast %61 : f32 to vector<8x128xf32>
    %63 = arith.addf %60, %62 : vector<8x128xf32>
    %64 = math.tanh %63 : vector<8x128xf32>
    %65 = vector.broadcast %57 : f32 to vector<8x128xf32>
    %66 = arith.mulf %65, %64 : vector<8x128xf32>
    %67 = arith.addf %56, %66 : vector<8x128xf32>
    %c6 = arith.constant 6 : index
    %68 = memref.load %arg3[%c6] : memref<16xf32, #tpu.memory_space<smem>>
    %c6_14 = arith.constant 6 : index
    %69 = memref.load %arg1[%c6_14] : memref<16xf32, #tpu.memory_space<smem>>
    %70 = vector.broadcast %69 : f32 to vector<8x128xf32>
    %71 = arith.mulf %70, %0 : vector<8x128xf32>
    %c6_15 = arith.constant 6 : index
    %72 = memref.load %arg2[%c6_15] : memref<16xf32, #tpu.memory_space<smem>>
    %73 = vector.broadcast %72 : f32 to vector<8x128xf32>
    %74 = arith.addf %71, %73 : vector<8x128xf32>
    %75 = math.tanh %74 : vector<8x128xf32>
    %76 = vector.broadcast %68 : f32 to vector<8x128xf32>
    %77 = arith.mulf %76, %75 : vector<8x128xf32>
    %78 = arith.addf %67, %77 : vector<8x128xf32>
    %c7 = arith.constant 7 : index
    %79 = memref.load %arg3[%c7] : memref<16xf32, #tpu.memory_space<smem>>
    %c7_16 = arith.constant 7 : index
    %80 = memref.load %arg1[%c7_16] : memref<16xf32, #tpu.memory_space<smem>>
    %81 = vector.broadcast %80 : f32 to vector<8x128xf32>
    %82 = arith.mulf %81, %0 : vector<8x128xf32>
    %c7_17 = arith.constant 7 : index
    %83 = memref.load %arg2[%c7_17] : memref<16xf32, #tpu.memory_space<smem>>
    %84 = vector.broadcast %83 : f32 to vector<8x128xf32>
    %85 = arith.addf %82, %84 : vector<8x128xf32>
    %86 = math.tanh %85 : vector<8x128xf32>
    %87 = vector.broadcast %79 : f32 to vector<8x128xf32>
    %88 = arith.mulf %87, %86 : vector<8x128xf32>
    %89 = arith.addf %78, %88 : vector<8x128xf32>
    %c8 = arith.constant 8 : index
    %90 = memref.load %arg3[%c8] : memref<16xf32, #tpu.memory_space<smem>>
    %c8_18 = arith.constant 8 : index
    %91 = memref.load %arg1[%c8_18] : memref<16xf32, #tpu.memory_space<smem>>
    %92 = vector.broadcast %91 : f32 to vector<8x128xf32>
    %93 = arith.mulf %92, %0 : vector<8x128xf32>
    %c8_19 = arith.constant 8 : index
    %94 = memref.load %arg2[%c8_19] : memref<16xf32, #tpu.memory_space<smem>>
    %95 = vector.broadcast %94 : f32 to vector<8x128xf32>
    %96 = arith.addf %93, %95 : vector<8x128xf32>
    %97 = math.tanh %96 : vector<8x128xf32>
    %98 = vector.broadcast %90 : f32 to vector<8x128xf32>
    %99 = arith.mulf %98, %97 : vector<8x128xf32>
    %100 = arith.addf %89, %99 : vector<8x128xf32>
    %c9 = arith.constant 9 : index
    %101 = memref.load %arg3[%c9] : memref<16xf32, #tpu.memory_space<smem>>
    %c9_20 = arith.constant 9 : index
    %102 = memref.load %arg1[%c9_20] : memref<16xf32, #tpu.memory_space<smem>>
    %103 = vector.broadcast %102 : f32 to vector<8x128xf32>
    %104 = arith.mulf %103, %0 : vector<8x128xf32>
    %c9_21 = arith.constant 9 : index
    %105 = memref.load %arg2[%c9_21] : memref<16xf32, #tpu.memory_space<smem>>
    %106 = vector.broadcast %105 : f32 to vector<8x128xf32>
    %107 = arith.addf %104, %106 : vector<8x128xf32>
    %108 = math.tanh %107 : vector<8x128xf32>
    %109 = vector.broadcast %101 : f32 to vector<8x128xf32>
    %110 = arith.mulf %109, %108 : vector<8x128xf32>
    %111 = arith.addf %100, %110 : vector<8x128xf32>
    %c10 = arith.constant 10 : index
    %112 = memref.load %arg3[%c10] : memref<16xf32, #tpu.memory_space<smem>>
    %c10_22 = arith.constant 10 : index
    %113 = memref.load %arg1[%c10_22] : memref<16xf32, #tpu.memory_space<smem>>
    %114 = vector.broadcast %113 : f32 to vector<8x128xf32>
    %115 = arith.mulf %114, %0 : vector<8x128xf32>
    %c10_23 = arith.constant 10 : index
    %116 = memref.load %arg2[%c10_23] : memref<16xf32, #tpu.memory_space<smem>>
    %117 = vector.broadcast %116 : f32 to vector<8x128xf32>
    %118 = arith.addf %115, %117 : vector<8x128xf32>
    %119 = math.tanh %118 : vector<8x128xf32>
    %120 = vector.broadcast %112 : f32 to vector<8x128xf32>
    %121 = arith.mulf %120, %119 : vector<8x128xf32>
    %122 = arith.addf %111, %121 : vector<8x128xf32>
    %c11 = arith.constant 11 : index
    %123 = memref.load %arg3[%c11] : memref<16xf32, #tpu.memory_space<smem>>
    %c11_24 = arith.constant 11 : index
    %124 = memref.load %arg1[%c11_24] : memref<16xf32, #tpu.memory_space<smem>>
    %125 = vector.broadcast %124 : f32 to vector<8x128xf32>
    %126 = arith.mulf %125, %0 : vector<8x128xf32>
    %c11_25 = arith.constant 11 : index
    %127 = memref.load %arg2[%c11_25] : memref<16xf32, #tpu.memory_space<smem>>
    %128 = vector.broadcast %127 : f32 to vector<8x128xf32>
    %129 = arith.addf %126, %128 : vector<8x128xf32>
    %130 = math.tanh %129 : vector<8x128xf32>
    %131 = vector.broadcast %123 : f32 to vector<8x128xf32>
    %132 = arith.mulf %131, %130 : vector<8x128xf32>
    %133 = arith.addf %122, %132 : vector<8x128xf32>
    %c12 = arith.constant 12 : index
    %134 = memref.load %arg3[%c12] : memref<16xf32, #tpu.memory_space<smem>>
    %c12_26 = arith.constant 12 : index
    %135 = memref.load %arg1[%c12_26] : memref<16xf32, #tpu.memory_space<smem>>
    %136 = vector.broadcast %135 : f32 to vector<8x128xf32>
    %137 = arith.mulf %136, %0 : vector<8x128xf32>
    %c12_27 = arith.constant 12 : index
    %138 = memref.load %arg2[%c12_27] : memref<16xf32, #tpu.memory_space<smem>>
    %139 = vector.broadcast %138 : f32 to vector<8x128xf32>
    %140 = arith.addf %137, %139 : vector<8x128xf32>
    %141 = math.tanh %140 : vector<8x128xf32>
    %142 = vector.broadcast %134 : f32 to vector<8x128xf32>
    %143 = arith.mulf %142, %141 : vector<8x128xf32>
    %144 = arith.addf %133, %143 : vector<8x128xf32>
    %c13 = arith.constant 13 : index
    %145 = memref.load %arg3[%c13] : memref<16xf32, #tpu.memory_space<smem>>
    %c13_28 = arith.constant 13 : index
    %146 = memref.load %arg1[%c13_28] : memref<16xf32, #tpu.memory_space<smem>>
    %147 = vector.broadcast %146 : f32 to vector<8x128xf32>
    %148 = arith.mulf %147, %0 : vector<8x128xf32>
    %c13_29 = arith.constant 13 : index
    %149 = memref.load %arg2[%c13_29] : memref<16xf32, #tpu.memory_space<smem>>
    %150 = vector.broadcast %149 : f32 to vector<8x128xf32>
    %151 = arith.addf %148, %150 : vector<8x128xf32>
    %152 = math.tanh %151 : vector<8x128xf32>
    %153 = vector.broadcast %145 : f32 to vector<8x128xf32>
    %154 = arith.mulf %153, %152 : vector<8x128xf32>
    %155 = arith.addf %144, %154 : vector<8x128xf32>
    %c14 = arith.constant 14 : index
    %156 = memref.load %arg3[%c14] : memref<16xf32, #tpu.memory_space<smem>>
    %c14_30 = arith.constant 14 : index
    %157 = memref.load %arg1[%c14_30] : memref<16xf32, #tpu.memory_space<smem>>
    %158 = vector.broadcast %157 : f32 to vector<8x128xf32>
    %159 = arith.mulf %158, %0 : vector<8x128xf32>
    %c14_31 = arith.constant 14 : index
    %160 = memref.load %arg2[%c14_31] : memref<16xf32, #tpu.memory_space<smem>>
    %161 = vector.broadcast %160 : f32 to vector<8x128xf32>
    %162 = arith.addf %159, %161 : vector<8x128xf32>
    %163 = math.tanh %162 : vector<8x128xf32>
    %164 = vector.broadcast %156 : f32 to vector<8x128xf32>
    %165 = arith.mulf %164, %163 : vector<8x128xf32>
    %166 = arith.addf %155, %165 : vector<8x128xf32>
    %c15 = arith.constant 15 : index
    %167 = memref.load %arg3[%c15] : memref<16xf32, #tpu.memory_space<smem>>
    %c15_32 = arith.constant 15 : index
    %168 = memref.load %arg1[%c15_32] : memref<16xf32, #tpu.memory_space<smem>>
    %169 = vector.broadcast %168 : f32 to vector<8x128xf32>
    %170 = arith.mulf %169, %0 : vector<8x128xf32>
    %c15_33 = arith.constant 15 : index
    %171 = memref.load %arg2[%c15_33] : memref<16xf32, #tpu.memory_space<smem>>
    %172 = vector.broadcast %171 : f32 to vector<8x128xf32>
    %173 = arith.addf %170, %172 : vector<8x128xf32>
    %174 = math.tanh %173 : vector<8x128xf32>
    %175 = vector.broadcast %167 : f32 to vector<8x128xf32>
    %176 = arith.mulf %175, %174 : vector<8x128xf32>
    %177 = arith.addf %166, %176 : vector<8x128xf32>
    %c0_34 = arith.constant 0 : index
    %178 = memref.load %arg4[%c0_34] : memref<1xf32, #tpu.memory_space<smem>>
    %179 = vector.broadcast %178 : f32 to vector<8x128xf32>
    %180 = arith.addf %177, %179 : vector<8x128xf32>
    %c0_35 = arith.constant 0 : index
    %c0_36 = arith.constant 0 : index
    %181 = vector.load %arg6[%c0_35, %c0_36] : memref<8x128xf32, #tpu.memory_space<vmem>>, vector<8x128xf32>
    tpu.vector_store %arg6[%c0_35, %c0_36], %180 {strides = array<i32>} : memref<8x128xf32, #tpu.memory_space<vmem>>, vector<8x128xf32>,
    return
  }
  func.func @transform_0(%arg0: i32) -> i32 {
    %c0_i32 = arith.constant 0 : i32
    %c0_i32_0 = arith.constant 0 : i32
    return %c0_i32 : i32
  }
  func.func @transform_1(%arg0: i32) -> i32 {
    %c0_i32 = arith.constant 0 : i32
    %c0_i32_0 = arith.constant 0 : i32
    return %c0_i32 : i32
  }
  func.func @transform_2(%arg0: i32) -> i32 {
    %c0_i32 = arith.constant 0 : i32
    %c0_i32_0 = arith.constant 0 : i32
    return %c0_i32 : i32
  }
  func.func @transform_3(%arg0: i32) -> i32 {
    %c0_i32 = arith.constant 0 : i32
    %c0_i32_0 = arith.constant 0 : i32
    return %c0_i32 : i32
  }
  func.func @transform_4(%arg0: i32) -> (i32, i32) {
    %c0_i32 = arith.constant 0 : i32
    %c0_i32_0 = arith.constant 0 : i32
    return %arg0, %c0_i32 : i32, i32
  }
  func.func @transform_5(%arg0: i32) -> (i32, i32) {
    %c0_i32 = arith.constant 0 : i32
    %c0_i32_0 = arith.constant 0 : i32
    return %arg0, %c0_i32 : i32, i32
  }
}

</mosaic_0001>

<llo_original>
// kernel: tpu_custom_call.1
$region0: #{tpu_custom_call.1}
  #allocation0 [shape = 'u32[]', space=smem, size = 0x4, offset = 0x4, fixed_abs, tag = 'smem constant byte address 0x4 - core index']
  #allocation1 [shape = 'u32[144,128]{1,0:T(1,128)}', space=vmem, size = 0x12000, scoped, tag = 'internal scratch']
  #allocation2 [shape = 'f32[1]{0:T(128)S(6)}', space=smem, size = 0x200, scoped, tag = 'scoped memory for tpu_custom_call.1']
  %s0 = inlined_call_operand.vmem [shape: f32[16], index: 0, kind: input, shape index: {}]
  %s1 = inlined_call_operand.vmem [shape: f32[16], index: 1, kind: input, shape index: {}]
  %s2 = inlined_call_operand.vmem [shape: f32[16], index: 2, kind: input, shape index: {}]
  %s3 = inlined_call_operand.<no memory space> [shape: f32[1], index: 3, kind: input, shape index: {}]
  %s4 = inlined_call_operand.vmem [shape: f32[8,128], index: 4, kind: input, shape index: {}]
  %s5 = inlined_call_operand.hbm [shape: f32[8,128], index: 5, kind: output, shape index: {}]
  %s6 = sld [smem:[#allocation0]]
  $region42: #{tpu_custom_call.1} parent=0
    _
  %s8 = ssub.s32 1, %s6
  %s9 = scalar_select 0, %s8, %s6
  %10 = sst [smem:[#allocation2]] %s3
  $region1: #{tpu_custom_call.1} parent=0
    #allocation3 [shape = 'u8[512]{0}', space=smem, size = 0x200, scoped, tag = 'input window, operand 0, single buffered']
    #allocation4 [shape = 's32[1]{0}', space=sflag, size = 0x4, scoped, tag = 'scoped memory for tpu_custom_call.1']
    #allocation5 [shape = 's32[1]{0}', space=sflag, size = 0x4, scoped, tag = 'scoped memory for tpu_custom_call.1']
    #allocation6 [shape = 'u8[512]{0}', space=smem, size = 0x200, scoped, tag = 'input window, operand 1, single buffered']
    #allocation7 [shape = 's32[1]{0}', space=sflag, size = 0x4, scoped, tag = 'scoped memory for tpu_custom_call.1']
    #allocation8 [shape = 'u8[512]{0}', space=smem, size = 0x200, scoped, tag = 'input window, operand 2, single buffered']
    #allocation9 [shape = 'u8[4096]{0}', space=vmem, size = 0x1000, scoped, tag = 'output window, operand 0, single buffered']
    %11 = vsyncpa [#allocation5], 0
    %12 = vsyncpa [#allocation7], 0
    %13 = vsyncpa [#allocation4], 0
    // Predicated region
    $region2: #{tpu_custom_call.1} parent=1 // pred_check
      _
    $region3: #{tpu_custom_call.1} parent=1 // pred_check_branch
      %15 = sbr.rel (0) target = $region5
    $region4: #{tpu_custom_call.1} parent=1 // pred_region
      %s17 = ssub.s32 16, 16
      %18 = vsyncadd [#allocation5], %s17
      %s20 = sshll.u32 %s0, 4
      %s21 = int_to_ptr.vmem [resolvable:$true] %s20
      %23 = dma.vmem_to_smem %s21, 16, [#allocation3], [#allocation5]
    $region5: #{tpu_custom_call.1} parent=1 // pred_fallthru
      _
    // Predicated region
    $region6: #{tpu_custom_call.1} parent=1 // pred_check
      _
    $region7: #{tpu_custom_call.1} parent=1 // pred_check_branch
      %25 = sbr.rel (0) target = $region9
    $region8: #{tpu_custom_call.1} parent=1 // pred_region
      %s27 = ssub.s32 16, 16
      %28 = vsyncadd [#allocation7], %s27
      %s30 = sshll.u32 %s1, 4
      %s31 = int_to_ptr.vmem [resolvable:$true] %s30
      %33 = dma.vmem_to_smem %s31, 16, [#allocation6], [#allocation7]
    $region9: #{tpu_custom_call.1} parent=1 // pred_fallthru
      _
    // Predicated region
    $region10: #{tpu_custom_call.1} parent=1 // pred_check
      _
    $region11: #{tpu_custom_call.1} parent=1 // pred_check_branch
      %35 = sbr.rel (0) target = $region13
    $region12: #{tpu_custom_call.1} parent=1 // pred_region
      %s37 = ssub.s32 16, 16
      %38 = vsyncadd [#allocation7], %s37
      %s40 = sshll.u32 %s2, 4
      %s41 = int_to_ptr.vmem [resolvable:$true] %s40
      %43 = dma.vmem_to_smem %s41, 16, [#allocation8], [#allocation7]
    $region13: #{tpu_custom_call.1} parent=1 // pred_fallthru
      _
    // Predicated region
    $region14: #{tpu_custom_call.1} parent=1 // pred_check
      _
    $region15: #{tpu_custom_call.1} parent=1 // pred_check_branch
      %45 = sbr.rel (0) target = $region17
    $region16: #{tpu_custom_call.1} parent=1 // pred_region
      _
    $region17: #{tpu_custom_call.1} parent=1 // pred_fallthru
      _
    // Predicated region
    $region18: #{tpu_custom_call.1} parent=1 // pred_check
      _
    $region19: #{tpu_custom_call.1} parent=1 // pred_check_branch
      %47 = sbr.rel (0) target = $region21
    $region20: #{tpu_custom_call.1} parent=1 // pred_region
      _
    $region21: #{tpu_custom_call.1} parent=1 // pred_fallthru
      _
    // Predicated region
    $region22: #{tpu_custom_call.1} parent=1 // pred_check
      _
    $region23: #{tpu_custom_call.1} parent=1 // pred_check_branch
      %49 = sbr.rel (0) target = $region25
    $region24: #{tpu_custom_call.1} parent=1 // pred_region
      %50 = dma.done [#allocation5], 16
    $region25: #{tpu_custom_call.1} parent=1 // pred_fallthru
      _
    // Predicated region
    $region26: #{tpu_custom_call.1} parent=1 // pred_check
      _
    $region27: #{tpu_custom_call.1} parent=1 // pred_check_branch
      %52 = sbr.rel (0) target = $region29
    $region28: #{tpu_custom_call.1} parent=1 // pred_region
      %53 = dma.done [#allocation7], 16
    $region29: #{tpu_custom_call.1} parent=1 // pred_fallthru
      _
    // Predicated region
    $region30: #{tpu_custom_call.1} parent=1 // pred_check
      _
    $region31: #{tpu_custom_call.1} parent=1 // pred_check_branch
      %55 = sbr.rel (0) target = $region33
    $region32: #{tpu_custom_call.1} parent=1 // pred_region
      %56 = dma.done [#allocation7], 16
    $region33: #{tpu_custom_call.1} parent=1 // pred_fallthru
      _
    %57 = sfence
    %v58 = vld [vmem:[%s4] sm:$0xff]
    %s59 = sld [smem:[#allocation8]]
    %s60 = sld [smem:[#allocation3]]
    %v61 = vstv %s60
    %v62 = vmul.f32 %v61, %v58
    %s63 = sld [smem:[#allocation6]]
    %v64 = vstv %s63
    %v65 = vadd.f32 %v62, %v64
    %v66 = vtanh.pop %v65
    %v67 = vstv %s59
    %v68 = vmul.f32 %v67, %v66
    %v69 = vadd.f32 %v68, 0.0
    %s70 = sld [smem:[#allocation8 + $0x1]]
    %s71 = sld [smem:[#allocation3 + $0x1]]
    %v72 = vstv %s71
    %v73 = vmul.f32 %v72, %v58
    %s74 = sld [smem:[#allocation6 + $0x1]]
    %v75 = vstv %s74
    %v76 = vadd.f32 %v73, %v75
    %v77 = vtanh.pop %v76
    %v78 = vstv %s70
    %v79 = vmul.f32 %v78, %v77
    %v80 = vadd.f32 %v69, %v79
    %s81 = sld [smem:[#allocation8 + $0x2]]
    %s82 = sld [smem:[#allocation3 + $0x2]]
    %v83 = vstv %s82
    %v84 = vmul.f32 %v83, %v58
    %s85 = sld [smem:[#allocation6 + $0x2]]
    %v86 = vstv %s85
    %v87 = vadd.f32 %v84, %v86
    %v88 = vtanh.pop %v87
    %v89 = vstv %s81
    %v90 = vmul.f32 %v89, %v88
    %v91 = vadd.f32 %v80, %v90
    %s92 = sld [smem:[#allocation8 + $0x3]]
    %s93 = sld [smem:[#allocation3 + $0x3]]
    %v94 = vstv %s93
    %v95 = vmul.f32 %v94, %v58
    %s96 = sld [smem:[#allocation6 + $0x3]]
    %v97 = vstv %s96
    %v98 = vadd.f32 %v95, %v97
    %v99 = vtanh.pop %v98
    %v100 = vstv %s92
    %v101 = vmul.f32 %v100, %v99
    %v102 = vadd.f32 %v91, %v101
    %s103 = sld [smem:[#allocation8 + $0x4]]
    %s104 = sld [smem:[#allocation3 + $0x4]]
    %v105 = vstv %s104
    %v106 = vmul.f32 %v105, %v58
    %s107 = sld [smem:[#allocation6 + $0x4]]
    %v108 = vstv %s107
    %v109 = vadd.f32 %v106, %v108
    %v110 = vtanh.pop %v109
    %v111 = vstv %s103
    %v112 = vmul.f32 %v111, %v110
    %v113 = vadd.f32 %v102, %v112
    %s114 = sld [smem:[#allocation8 + $0x5]]
    %s115 = sld [smem:[#allocation3 + $0x5]]
    %v116 = vstv %s115
    %v117 = vmul.f32 %v116, %v58
    %s118 = sld [smem:[#allocation6 + $0x5]]
    %v119 = vstv %s118
    %v120 = vadd.f32 %v117, %v119
    %v121 = vtanh.pop %v120
    %v122 = vstv %s114
    %v123 = vmul.f32 %v122, %v121
    %v124 = vadd.f32 %v113, %v123
    %s125 = sld [smem:[#allocation8 + $0x6]]
    %s126 = sld [smem:[#allocation3 + $0x6]]
    %v127 = vstv %s126
    %v128 = vmul.f32 %v127, %v58
    %s129 = sld [smem:[#allocation6 + $0x6]]
    %v130 = vstv %s129
    %v131 = vadd.f32 %v128, %v130
    %v132 = vtanh.pop %v131
    %v133 = vstv %s125
    %v134 = vmul.f32 %v133, %v132
    %v135 = vadd.f32 %v124, %v134
    %s136 = sld [smem:[#allocation8 + $0x7]]
    %s137 = sld [smem:[#allocation3 + $0x7]]
    %v138 = vstv %s137
    %v139 = vmul.f32 %v138, %v58
    %s140 = sld [smem:[#allocation6 + $0x7]]
    %v141 = vstv %s140
    %v142 = vadd.f32 %v139, %v141
    %v143 = vtanh.pop %v142
    %v144 = vstv %s136
    %v145 = vmul.f32 %v144, %v143
    %v146 = vadd.f32 %v135, %v145
    %s147 = sld [smem:[#allocation8 + $0x8]]
    %s148 = sld [smem:[#allocation3 + $0x8]]
    %v149 = vstv %s148
    %v150 = vmul.f32 %v149, %v58
    %s151 = sld [smem:[#allocation6 + $0x8]]
    %v152 = vstv %s151
    %v153 = vadd.f32 %v150, %v152
    %v154 = vtanh.pop %v153
    %v155 = vstv %s147
    %v156 = vmul.f32 %v155, %v154
    %v157 = vadd.f32 %v146, %v156
    %s158 = sld [smem:[#allocation8 + $0x9]]
    %s159 = sld [smem:[#allocation3 + $0x9]]
    %v160 = vstv %s159
    %v161 = vmul.f32 %v160, %v58
    %s162 = sld [smem:[#allocation6 + $0x9]]
    %v163 = vstv %s162
    %v164 = vadd.f32 %v161, %v163
    %v165 = vtanh.pop %v164
    %v166 = vstv %s158
    %v167 = vmul.f32 %v166, %v165
    %v168 = vadd.f32 %v157, %v167
    %s169 = sld [smem:[#allocation8 + $0xa]]
    %s170 = sld [smem:[#allocation3 + $0xa]]
    %v171 = vstv %s170
    %v172 = vmul.f32 %v171, %v58
    %s173 = sld [smem:[#allocation6 + $0xa]]
    %v174 = vstv %s173
    %v175 = vadd.f32 %v172, %v174
    %v176 = vtanh.pop %v175
    %v177 = vstv %s169
    %v178 = vmul.f32 %v177, %v176
    %v179 = vadd.f32 %v168, %v178
    %s180 = sld [smem:[#allocation8 + $0xb]]
    %s181 = sld [smem:[#allocation3 + $0xb]]
    %v182 = vstv %s181
    %v183 = vmul.f32 %v182, %v58
    %s184 = sld [smem:[#allocation6 + $0xb]]
    %v185 = vstv %s184
    %v186 = vadd.f32 %v183, %v185
    %v187 = vtanh.pop %v186
    %v188 = vstv %s180
    %v189 = vmul.f32 %v188, %v187
    %v190 = vadd.f32 %v179, %v189
    %s191 = sld [smem:[#allocation8 + $0xc]]
    %s192 = sld [smem:[#allocation3 + $0xc]]
    %v193 = vstv %s192
    %v194 = vmul.f32 %v193, %v58
    %s195 = sld [smem:[#allocation6 + $0xc]]
    %v196 = vstv %s195
    %v197 = vadd.f32 %v194, %v196
    %v198 = vtanh.pop %v197
    %v199 = vstv %s191
    %v200 = vmul.f32 %v199, %v198
    %v201 = vadd.f32 %v190, %v200
    %s202 = sld [smem:[#allocation8 + $0xd]]
    %s203 = sld [smem:[#allocation3 + $0xd]]
    %v204 = vstv %s203
    %v205 = vmul.f32 %v204, %v58
    %s206 = sld [smem:[#allocation6 + $0xd]]
    %v207 = vstv %s206
    %v208 = vadd.f32 %v205, %v207
    %v209 = vtanh.pop %v208
    %v210 = vstv %s202
    %v211 = vmul.f32 %v210, %v209
    %v212 = vadd.f32 %v201, %v211
    %s213 = sld [smem:[#allocation8 + $0xe]]
    %s214 = sld [smem:[#allocation3 + $0xe]]
    %v215 = vstv %s214
    %v216 = vmul.f32 %v215, %v58
    %s217 = sld [smem:[#allocation6 + $0xe]]
    %v218 = vstv %s217
    %v219 = vadd.f32 %v216, %v218
    %v220 = vtanh.pop %v219
    %v221 = vstv %s213
    %v222 = vmul.f32 %v221, %v220
    %v223 = vadd.f32 %v212, %v222
    %s224 = sld [smem:[#allocation8 + $0xf]]
    %s225 = sld [smem:[#allocation3 + $0xf]]
    %v226 = vstv %s225
    %v227 = vmul.f32 %v226, %v58
    %s228 = sld [smem:[#allocation6 + $0xf]]
    %v229 = vstv %s228
    %v230 = vadd.f32 %v227, %v229
    %v231 = vtanh.pop %v230
    %v232 = vstv %s224
    %v233 = vmul.f32 %v232, %v231
    %v234 = vadd.f32 %v223, %v233
    %s235 = sld [smem:[#allocation2]]
    %v236 = vstv %s235
    %v237 = vadd.f32 %v234, %v236
    %238 = vst [vmem:[#allocation9] sm:$0xff] %v237
    // Predicated region
    $region34: #{tpu_custom_call.1} parent=1 // pred_check
      _
    $region35: #{tpu_custom_call.1} parent=1 // pred_check_branch
      %240 = sbr.rel (0) target = $region37
    $region36: #{tpu_custom_call.1} parent=1 // pred_region
      %s242 = ssub.s32 128, 128
      %243 = vsyncadd [#allocation4], %s242
      %s245 = sshll.u32 [#allocation9], 4
      %s246 = int_to_ptr.vmem [resolvable:$true] %s245
      %248 = dma.vmem_to_hbm [thread:$0]  %s246, 128, %s5, [#allocation4]
    $region37: #{tpu_custom_call.1} parent=1 // pred_fallthru
      _
    // Predicated region
    $region38: #{tpu_custom_call.1} parent=1 // pred_check
      _
    $region39: #{tpu_custom_call.1} parent=1 // pred_check_branch
      %250 = sbr.rel (0) target = $region41
    $region40: #{tpu_custom_call.1} parent=1 // pred_region
      %251 = dma.done [#allocation4], 128
    $region41: #{tpu_custom_call.1} parent=1 // pred_fallthru
      _
    %252 = vsyncpa [#allocation4], 1
    %253 = vsyncpa [#allocation5], 1
    %254 = vsyncpa [#allocation7], 1

</llo_original>
